<compile_context>
chip_gen: v7x
topology: tpu7x:2x2x1
jax: 0.10.0
libtpu: 0.0.40
codegen_flags: <defaults>
</compile_context>

<pallas_src>
import functools

import jax
import jax.numpy as jnp
from jax.experimental import pallas as pl
from jax.experimental.pallas import tpu as pltpu


# ----------------------------------------------------------------------------
# Host-side parameter glue (plain JAX)
# ----------------------------------------------------------------------------
def _sawb_weight_codes(w_oihw, nbit, k):
    # TODO(synk): exact int_conv2d 'mean' SAWB coefficients not provided; uses the
    # common clip-at-k*mean|w| formulation with 2^(nbit-1)-1 levels.
    alpha_w = k * jnp.mean(jnp.abs(w_oihw))
    n_levels = 2.0 ** (nbit - 1) - 1.0
    codes = jnp.round(jnp.clip(w_oihw, -alpha_w, alpha_w) * (n_levels / alpha_w))
    step = alpha_w / n_levels                      # dequant: w_q = codes * step
    cout, cin = w_oihw.shape[0], w_oihw.shape[1]
    # (Cout,Cin,3,3) -> (Cout,3,3,Cin) -> (Cout, 9*Cin); small-integer codes are
    # exact in bf16, so the MXU matmul on codes is exact.
    w_flat = jnp.transpose(codes, (0, 2, 3, 1)).reshape(cout, 9 * cin)
    return w_flat.astype(jnp.bfloat16), step


def _fold_bn(gamma, beta, mean, var, eps=1e-5):
    scale = gamma / jnp.sqrt(var + eps)
    return scale, beta - mean * scale


def _pad_mask(H, W, b_tile):
    """(9, b_tile*H*W) f32 validity mask for a 3x3 / pad=1 / stride=1 conv."""
    hw = H * W
    h = jnp.arange(hw, dtype=jnp.int32) // W
    w = jnp.arange(hw, dtype=jnp.int32) % W
    rows = []
    for dy in (-1, 0, 1):
        for dx in (-1, 0, 1):
            rows.append((h + dy >= 0) & (h + dy < H) & (w + dx >= 0) & (w + dx < W))
    m = jnp.stack(rows, axis=0).astype(jnp.float32)            # (9, HW)
    return jnp.tile(m, (1, b_tile))                            # (9, b_tile*HW)


# ----------------------------------------------------------------------------
# Fused Pallas kernel: (conv1+bn1+crelu) -> (conv2+bn2+residual+crelu)
# ----------------------------------------------------------------------------
def _make_block_kernel(H, W, b_tile, alpha, qscale):
    HW = H * W
    lanes = b_tile * HW
    inv_qscale = 1.0 / qscale
    offsets = [dy * W + dx for dy in (-1, 0, 1) for dx in (-1, 0, 1)]

    def kernel(x_ref, w1_ref, w2_ref, aff_ref, mask_ref, o_ref):
        # Lane-concatenate the batch tile: (Cin, b_tile*HW).  Leading-axis slices
        # + 128-aligned lane concat -> no sublane shuffles, no transposes.
        if b_tile > 1:
            xb = jnp.concatenate([x_ref[b] for b in range(b_tile)], axis=1)
        else:
            xb = x_ref[0]
        m = mask_ref[...]                                      # (9, b_tile*HW) f32

        def im2col(act):
            """(C, B*HW) f32 -> (9*C, B*HW) bf16 column matrix.

            Rolls on the combined lane axis; any position that would wrap across
            an image or spatial boundary is exactly a masked-out padding tap.
            Everything stays f32 (C rows == one f32 sublane tile, so the row
            concat is layout-free); single bf16 cast of the whole matrix.
            """
            blocks = []
            for t, off in enumerate(offsets):
                shifted = act if off == 0 else pltpu.roll(
                    act, shift=(-off) % lanes, axis=1)
                blocks.append(shifted * m[t:t + 1])
            return jnp.concatenate(blocks, axis=0).astype(jnp.bfloat16)

        es1 = aff_ref[:, 0:1]      # (Cout, 1) folded scales / biases
        eb1 = aff_ref[:, 1:2]
        es2 = aff_ref[:, 2:3]
        eb2 = aff_ref[:, 3:4]

        # ---- stage 1: conv1 + BN1 + ClippedReLU (abit codes stay in VMEM) ----
        # TODO(synk): stage-1 activations are raw f32 cast to bf16 for the MXU
        # (tiny rounding vs. the f32 reference); stage-2 code matmul is exact.
        acc1 = jnp.dot(w1_ref[...], im2col(xb),
                       preferred_element_type=jnp.float32)      # (Cout, B*HW)
        y1 = acc1 * es1 + eb1
        codes1 = jnp.round(jnp.clip(y1, 0.0, alpha) * qscale)   # ints [0, 2^abit-1]

        # ---- stage 2: conv2 + BN2 + residual add + ClippedReLU ----------------
        acc2 = jnp.dot(w2_ref[...], im2col(codes1),
                       preferred_element_type=jnp.float32)      # (Cout, B*HW)
        y2 = acc2 * es2 + eb2 + xb                              # residual, same layout
        out = (jnp.round(jnp.clip(y2, 0.0, alpha) * qscale)
               * inv_qscale).astype(o_ref.dtype)

        # Lane-dense, 128-aligned stores per image in the tile.
        for b in range(b_tile):
            o_ref[b] = out[:, b * HW:(b + 1) * HW]

    return kernel


def _fused_basic_block(x_flat, w1_codes, w2_codes, affine, mask,
                       *, H, W, b_tile, alpha, qscale):
    N, Cin, HW = x_flat.shape
    Cout = w1_codes.shape[0]
    assert N % b_tile == 0
    kernel = _make_block_kernel(H, W, b_tile, float(alpha), float(qscale))
    return pl.pallas_call(
        kernel,
        out_shape=jax.ShapeDtypeStruct((N, Cout, HW), x_flat.dtype),
        grid_spec=pltpu.PrefetchScalarGridSpec(
            num_scalar_prefetch=0,
            grid=(N // b_tile,),
            in_specs=[
                pl.BlockSpec((b_tile, Cin, HW), lambda g: (g, 0, 0)),   # images
                pl.BlockSpec((Cout, 9 * Cin), lambda g: (0, 0)),        # conv1 codes
                pl.BlockSpec((Cout, 9 * Cout), lambda g: (0, 0)),       # conv2 codes
                pl.BlockSpec((Cout, 4), lambda g: (0, 0)),              # folded BN affine
                pl.BlockSpec((9, b_tile * HW), lambda g: (0, 0)),       # padding mask
            ],
            out_specs=pl.BlockSpec((b_tile, Cout, HW), lambda g: (g, 0, 0)),
        ),
        compiler_params=pltpu.CompilerParams(
            dimension_semantics=("parallel",),
            vmem_limit_bytes=48 * 1024 * 1024),
    )(x_flat, w1_codes, w2_codes, affine, mask)


# ----------------------------------------------------------------------------
# BasicBlock forward (stride=1, downsample=None)
# ----------------------------------------------------------------------------
def basic_block_forward(x_nchw, params, *, wbit=4, abit=4, alpha_init=10.0,
                        k=2.0, b_tile=2):
    # TODO(synk): PACT alpha is a learned parameter in a trained model; here it is
    # the module-default alpha_init.  stride>1 / downsample branch not implemented
    # (module defaults: stride=1, downsample=None).
    N, C, H, W = x_nchw.shape
    planes = params["conv1_w"].shape[0]
    assert planes == C and params["conv1_w"].shape[1] == C, \
        "stride=1 / downsample=None BasicBlock requires inplanes == planes"
    if N % b_tile != 0:
        b_tile = 1
    qscale = (2.0 ** abit - 1.0) / alpha_init

    w1, step1 = _sawb_weight_codes(params["conv1_w"], wbit, k)
    w2, step2 = _sawb_weight_codes(params["conv2_w"], wbit, k)
    s1, b1 = _fold_bn(params["bn1_gamma"], params["bn1_beta"],
                      params["bn1_mean"], params["bn1_var"])
    s2, b2 = _fold_bn(params["bn2_gamma"], params["bn2_beta"],
                      params["bn2_mean"], params["bn2_var"])

    # Fold weight-dequant and activation-dequant scales into the BN affine so the
    # in-kernel matmuls run directly on integer codes.
    affine = jnp.stack([s1 * step1, b1, s2 * step2 / qscale, b2],
                       axis=1).astype(jnp.float32)              # (Cout, 4)
    mask = _pad_mask(H, W, b_tile)

    x_flat = x_nchw.reshape(N, C, H * W)   # layout-preserving, no wrapper transpose
    out = _fused_basic_block(x_flat, w1, w2, affine, mask,
                             H=H, W=W, b_tile=b_tile,
                             alpha=alpha_init, qscale=qscale)
    return out.reshape(N, -1, H, W)


# ----------------------------------------------------------------------------
if __name__ == "__main__":
    key = jax.random.PRNGKey(0)
    ks = jax.random.split(key, 12)

    # inplanes = planes = 8; H*W = 256 (lane-dense); N=8 with B_TILE=2 -> grid=4
    # (>=2 steps per core on v7x, real pipelining on all generations).
    N, C, H, W = 8, 8, 16, 16
    planes = 8

    x = jax.random.normal(ks[0], (N, C, H, W), jnp.float32)

    params = {
        "conv1_w": jax.random.normal(ks[1], (planes, C, 3, 3), jnp.float32) * 0.1,
        "conv2_w": jax.random.normal(ks[2], (planes, planes, 3, 3), jnp.float32) * 0.1,
        "bn1_gamma": 1.0 + 0.1 * jax.random.normal(ks[3], (planes,), jnp.float32),
        "bn1_beta": 0.1 * jax.random.normal(ks[4], (planes,), jnp.float32),
        "bn1_mean": 0.05 * jax.random.normal(ks[5], (planes,), jnp.float32),
        "bn1_var": 1.0 + 0.1 * jnp.abs(jax.random.normal(ks[6], (planes,), jnp.float32)),
        "bn2_gamma": 1.0 + 0.1 * jax.random.normal(ks[7], (planes,), jnp.float32),
        "bn2_beta": 0.1 * jax.random.normal(ks[8], (planes,), jnp.float32),
        "bn2_mean": 0.05 * jax.random.normal(ks[9], (planes,), jnp.float32),
        "bn2_var": 1.0 + 0.1 * jnp.abs(jax.random.normal(ks[10], (planes,), jnp.float32)),
    }

    fwd = jax.jit(functools.partial(basic_block_forward,
                                    wbit=4, abit=4, alpha_init=10.0, k=2.0, b_tile=2))
    out = fwd(x, params)
    jax.block_until_ready(out)
    assert out.shape == (N, planes, H, W)
    assert bool(jnp.all(jnp.isfinite(out)))
    print("KERNEL_OK")
</pallas_src>

<mosaic_0001>
module attributes {stable_mosaic.version = 11 : i64} {
  func.func @kernel(%arg0: i32, %arg1: memref<2x8x256xf32, #tpu.memory_space<vmem>>, %arg2: memref<8x72xbf16, #tpu.memory_space<vmem>>, %arg3: memref<8x72xbf16, #tpu.memory_space<vmem>>, %arg4: memref<8x4xf32, #tpu.memory_space<vmem>>, %arg5: memref<9x512xf32, #tpu.memory_space<vmem>>, %arg6: memref<2x8x256xf32, #tpu.memory_space<vmem>>) attributes {dimension_semantics = [#tpu.dimension_semantics<parallel>], iteration_bounds = array<i64: 4>, scalar_prefetch = 0 : i64, scratch_operands = 0 : i64, tpu.core_type = #tpu.core_type<tc>, window_params = [{transform_indices = @transform_0, window_bounds = array<i64: 2, 8, 256>}, {pipeline_mode = #tpu.pipeline_mode<synchronous>, transform_indices = @transform_1, window_bounds = array<i64: 8, 72>}, {pipeline_mode = #tpu.pipeline_mode<synchronous>, transform_indices = @transform_2, window_bounds = array<i64: 8, 72>}, {pipeline_mode = #tpu.pipeline_mode<synchronous>, transform_indices = @transform_3, window_bounds = array<i64: 8, 4>}, {pipeline_mode = #tpu.pipeline_mode<synchronous>, transform_indices = @transform_4, window_bounds = array<i64: 9, 512>}, {transform_indices = @transform_5, window_bounds = array<i64: 2, 8, 256>}]} {
    %c0 = arith.constant 0 : index
    %c0_0 = arith.constant 0 : index
    %c0_1 = arith.constant 0 : index
    %0 = vector.load %arg1[%c0, %c0_0, %c0_1] : memref<2x8x256xf32, #tpu.memory_space<vmem>>, vector<1x8x256xf32>
    %1 = vector.shape_cast %0 : vector<1x8x256xf32> to vector<8x256xf32>
    %c1 = arith.constant 1 : index
    %c0_2 = arith.constant 0 : index
    %c0_3 = arith.constant 0 : index
    %2 = vector.load %arg1[%c1, %c0_2, %c0_3] : memref<2x8x256xf32, #tpu.memory_space<vmem>>, vector<1x8x256xf32>
    %3 = vector.shape_cast %2 : vector<1x8x256xf32> to vector<8x256xf32>
    %4 = tpu.concatenate %1, %3 in 1 : vector<8x256xf32>, vector<8x256xf32> -> vector<8x512xf32>
    %c0_4 = arith.constant 0 : index
    %c0_5 = arith.constant 0 : index
    %5 = vector.load %arg5[%c0_4, %c0_5] : memref<9x512xf32, #tpu.memory_space<vmem>>, vector<9x512xf32>
    %c0_6 = arith.constant 0 : index
    %c0_7 = arith.constant 0 : index
    %6 = vector.load %arg4[%c0_6, %c0_7] : memref<8x4xf32, #tpu.memory_space<vmem>>, vector<8x1xf32>
    %c0_8 = arith.constant 0 : index
    %c1_9 = arith.constant 1 : index
    %7 = vector.load %arg4[%c0_8, %c1_9] : memref<8x4xf32, #tpu.memory_space<vmem>>, vector<8x1xf32>
    %c0_10 = arith.constant 0 : index
    %c2 = arith.constant 2 : index
    %8 = vector.load %arg4[%c0_10, %c2] : memref<8x4xf32, #tpu.memory_space<vmem>>, vector<8x1xf32>
    %c0_11 = arith.constant 0 : index
    %c3 = arith.constant 3 : index
    %9 = vector.load %arg4[%c0_11, %c3] : memref<8x4xf32, #tpu.memory_space<vmem>>, vector<8x1xf32>
    %c0_12 = arith.constant 0 : index
    %c0_13 = arith.constant 0 : index
    %10 = vector.load %arg2[%c0_12, %c0_13] : memref<8x72xbf16, #tpu.memory_space<vmem>>, vector<8x72xbf16>
    %c17_i32 = arith.constant 17 : i32
    %11 = tpu.dynamic_rotate %4 by %c17_i32 dim 1 : vector<8x512xf32>, i32 -> vector<8x512xf32>
    %12 = vector.extract_strided_slice %5 {offsets = [0, 0], sizes = [1, 512], strides = [1, 1]} : vector<9x512xf32> to vector<1x512xf32>
    %13 = vector.broadcast %12 : vector<1x512xf32> to vector<8x512xf32>
    %14 = arith.mulf %11, %13 : vector<8x512xf32>
    %c16_i32 = arith.constant 16 : i32
    %15 = tpu.dynamic_rotate %4 by %c16_i32 dim 1 : vector<8x512xf32>, i32 -> vector<8x512xf32>
    %16 = vector.extract_strided_slice %5 {offsets = [1, 0], sizes = [1, 512], strides = [1, 1]} : vector<9x512xf32> to vector<1x512xf32>
    %17 = vector.broadcast %16 : vector<1x512xf32> to vector<8x512xf32>
    %18 = arith.mulf %15, %17 : vector<8x512xf32>
    %c15_i32 = arith.constant 15 : i32
    %19 = tpu.dynamic_rotate %4 by %c15_i32 dim 1 : vector<8x512xf32>, i32 -> vector<8x512xf32>
    %20 = vector.extract_strided_slice %5 {offsets = [2, 0], sizes = [1, 512], strides = [1, 1]} : vector<9x512xf32> to vector<1x512xf32>
    %21 = vector.broadcast %20 : vector<1x512xf32> to vector<8x512xf32>
    %22 = arith.mulf %19, %21 : vector<8x512xf32>
    %c1_i32 = arith.constant 1 : i32
    %23 = tpu.dynamic_rotate %4 by %c1_i32 dim 1 : vector<8x512xf32>, i32 -> vector<8x512xf32>
    %24 = vector.extract_strided_slice %5 {offsets = [3, 0], sizes = [1, 512], strides = [1, 1]} : vector<9x512xf32> to vector<1x512xf32>
    %25 = vector.broadcast %24 : vector<1x512xf32> to vector<8x512xf32>
    %26 = arith.mulf %23, %25 : vector<8x512xf32>
    %27 = vector.extract_strided_slice %5 {offsets = [4, 0], sizes = [1, 512], strides = [1, 1]} : vector<9x512xf32> to vector<1x512xf32>
    %28 = vector.broadcast %27 : vector<1x512xf32> to vector<8x512xf32>
    %29 = arith.mulf %4, %28 : vector<8x512xf32>
    %c511_i32 = arith.constant 511 : i32
    %30 = tpu.dynamic_rotate %4 by %c511_i32 dim 1 : vector<8x512xf32>, i32 -> vector<8x512xf32>
    %31 = vector.extract_strided_slice %5 {offsets = [5, 0], sizes = [1, 512], strides = [1, 1]} : vector<9x512xf32> to vector<1x512xf32>
    %32 = vector.broadcast %31 : vector<1x512xf32> to vector<8x512xf32>
    %33 = arith.mulf %30, %32 : vector<8x512xf32>
    %c497_i32 = arith.constant 497 : i32
    %34 = tpu.dynamic_rotate %4 by %c497_i32 dim 1 : vector<8x512xf32>, i32 -> vector<8x512xf32>
    %35 = vector.extract_strided_slice %5 {offsets = [6, 0], sizes = [1, 512], strides = [1, 1]} : vector<9x512xf32> to vector<1x512xf32>
    %36 = vector.broadcast %35 : vector<1x512xf32> to vector<8x512xf32>
    %37 = arith.mulf %34, %36 : vector<8x512xf32>
    %c496_i32 = arith.constant 496 : i32
    %38 = tpu.dynamic_rotate %4 by %c496_i32 dim 1 : vector<8x512xf32>, i32 -> vector<8x512xf32>
    %39 = vector.extract_strided_slice %5 {offsets = [7, 0], sizes = [1, 512], strides = [1, 1]} : vector<9x512xf32> to vector<1x512xf32>
    %40 = vector.broadcast %39 : vector<1x512xf32> to vector<8x512xf32>
    %41 = arith.mulf %38, %40 : vector<8x512xf32>
    %c495_i32 = arith.constant 495 : i32
    %42 = tpu.dynamic_rotate %4 by %c495_i32 dim 1 : vector<8x512xf32>, i32 -> vector<8x512xf32>
    %43 = vector.extract_strided_slice %5 {offsets = [8, 0], sizes = [1, 512], strides = [1, 1]} : vector<9x512xf32> to vector<1x512xf32>
    %44 = vector.broadcast %43 : vector<1x512xf32> to vector<8x512xf32>
    %45 = arith.mulf %42, %44 : vector<8x512xf32>
    %46 = tpu.concatenate %14, %18, %22, %26, %29, %33, %37, %41, %45 in 0 : vector<8x512xf32>, vector<8x512xf32>, vector<8x512xf32>, vector<8x512xf32>, vector<8x512xf32>, vector<8x512xf32>, vector<8x512xf32>, vector<8x512xf32>, vector<8x512xf32> -> vector<72x512xf32>
    %47 = arith.truncf %46 : vector<72x512xf32> to vector<72x512xbf16>
    %cst = arith.constant dense<0.000000e+00> : vector<8x512xf32>
    %48 = tpu.matmul %10, %47, %cst {dimension_numbers = #tpu.dot_dimension_numbers<[1], [0], [0], [1], [0, 0, 1, 1], [], []>} : vector<8x72xbf16>, vector<72x512xbf16>, vector<8x512xf32> -> vector<8x512xf32>
    %49 = vector.broadcast %6 : vector<8x1xf32> to vector<8x512xf32>
    %50 = arith.mulf %48, %49 : vector<8x512xf32>
    %51 = vector.broadcast %7 : vector<8x1xf32> to vector<8x512xf32>
    %52 = arith.addf %50, %51 : vector<8x512xf32>
    %cst_14 = arith.constant 0.000000e+00 : f32
    %cst_15 = arith.constant 1.000000e+01 : f32
    %53 = vector.broadcast %cst_14 : f32 to vector<8x512xf32>
    %54 = arith.maximumf %53, %52 : vector<8x512xf32>
    %55 = vector.broadcast %cst_15 : f32 to vector<8x512xf32>
    %56 = arith.minimumf %55, %54 : vector<8x512xf32>
    %cst_16 = arith.constant 1.500000e+00 : f32
    %57 = vector.broadcast %cst_16 : f32 to vector<8x512xf32>
    %58 = arith.mulf %56, %57 : vector<8x512xf32>
    %59 = math.roundeven %58 : vector<8x512xf32>
    %c0_17 = arith.constant 0 : index
    %c0_18 = arith.constant 0 : index
    %60 = vector.load %arg3[%c0_17, %c0_18] : memref<8x72xbf16, #tpu.memory_space<vmem>>, vector<8x72xbf16>
    %c17_i32_19 = arith.constant 17 : i32
    %61 = tpu.dynamic_rotate %59 by %c17_i32_19 dim 1 : vector<8x512xf32>, i32 -> vector<8x512xf32>
    %62 = vector.extract_strided_slice %5 {offsets = [0, 0], sizes = [1, 512], strides = [1, 1]} : vector<9x512xf32> to vector<1x512xf32>
    %63 = vector.broadcast %62 : vector<1x512xf32> to vector<8x512xf32>
    %64 = arith.mulf %61, %63 : vector<8x512xf32>
    %c16_i32_20 = arith.constant 16 : i32
    %65 = tpu.dynamic_rotate %59 by %c16_i32_20 dim 1 : vector<8x512xf32>, i32 -> vector<8x512xf32>
    %66 = vector.extract_strided_slice %5 {offsets = [1, 0], sizes = [1, 512], strides = [1, 1]} : vector<9x512xf32> to vector<1x512xf32>
    %67 = vector.broadcast %66 : vector<1x512xf32> to vector<8x512xf32>
    %68 = arith.mulf %65, %67 : vector<8x512xf32>
    %c15_i32_21 = arith.constant 15 : i32
    %69 = tpu.dynamic_rotate %59 by %c15_i32_21 dim 1 : vector<8x512xf32>, i32 -> vector<8x512xf32>
    %70 = vector.extract_strided_slice %5 {offsets = [2, 0], sizes = [1, 512], strides = [1, 1]} : vector<9x512xf32> to vector<1x512xf32>
    %71 = vector.broadcast %70 : vector<1x512xf32> to vector<8x512xf32>
    %72 = arith.mulf %69, %71 : vector<8x512xf32>
    %c1_i32_22 = arith.constant 1 : i32
    %73 = tpu.dynamic_rotate %59 by %c1_i32_22 dim 1 : vector<8x512xf32>, i32 -> vector<8x512xf32>
    %74 = vector.extract_strided_slice %5 {offsets = [3, 0], sizes = [1, 512], strides = [1, 1]} : vector<9x512xf32> to vector<1x512xf32>
    %75 = vector.broadcast %74 : vector<1x512xf32> to vector<8x512xf32>
    %76 = arith.mulf %73, %75 : vector<8x512xf32>
    %77 = vector.extract_strided_slice %5 {offsets = [4, 0], sizes = [1, 512], strides = [1, 1]} : vector<9x512xf32> to vector<1x512xf32>
    %78 = vector.broadcast %77 : vector<1x512xf32> to vector<8x512xf32>
    %79 = arith.mulf %59, %78 : vector<8x512xf32>
    %c511_i32_23 = arith.constant 511 : i32
    %80 = tpu.dynamic_rotate %59 by %c511_i32_23 dim 1 : vector<8x512xf32>, i32 -> vector<8x512xf32>
    %81 = vector.extract_strided_slice %5 {offsets = [5, 0], sizes = [1, 512], strides = [1, 1]} : vector<9x512xf32> to vector<1x512xf32>
    %82 = vector.broadcast %81 : vector<1x512xf32> to vector<8x512xf32>
    %83 = arith.mulf %80, %82 : vector<8x512xf32>
    %c497_i32_24 = arith.constant 497 : i32
    %84 = tpu.dynamic_rotate %59 by %c497_i32_24 dim 1 : vector<8x512xf32>, i32 -> vector<8x512xf32>
    %85 = vector.extract_strided_slice %5 {offsets = [6, 0], sizes = [1, 512], strides = [1, 1]} : vector<9x512xf32> to vector<1x512xf32>
    %86 = vector.broadcast %85 : vector<1x512xf32> to vector<8x512xf32>
    %87 = arith.mulf %84, %86 : vector<8x512xf32>
    %c496_i32_25 = arith.constant 496 : i32
    %88 = tpu.dynamic_rotate %59 by %c496_i32_25 dim 1 : vector<8x512xf32>, i32 -> vector<8x512xf32>
    %89 = vector.extract_strided_slice %5 {offsets = [7, 0], sizes = [1, 512], strides = [1, 1]} : vector<9x512xf32> to vector<1x512xf32>
    %90 = vector.broadcast %89 : vector<1x512xf32> to vector<8x512xf32>
    %91 = arith.mulf %88, %90 : vector<8x512xf32>
    %c495_i32_26 = arith.constant 495 : i32
    %92 = tpu.dynamic_rotate %59 by %c495_i32_26 dim 1 : vector<8x512xf32>, i32 -> vector<8x512xf32>
    %93 = vector.extract_strided_slice %5 {offsets = [8, 0], sizes = [1, 512], strides = [1, 1]} : vector<9x512xf32> to vector<1x512xf32>
    %94 = vector.broadcast %93 : vector<1x512xf32> to vector<8x512xf32>
    %95 = arith.mulf %92, %94 : vector<8x512xf32>
    %96 = tpu.concatenate %64, %68, %72, %76, %79, %83, %87, %91, %95 in 0 : vector<8x512xf32>, vector<8x512xf32>, vector<8x512xf32>, vector<8x512xf32>, vector<8x512xf32>, vector<8x512xf32>, vector<8x512xf32>, vector<8x512xf32>, vector<8x512xf32> -> vector<72x512xf32>
    %97 = arith.truncf %96 : vector<72x512xf32> to vector<72x512xbf16>
    %cst_27 = arith.constant dense<0.000000e+00> : vector<8x512xf32>
    %98 = tpu.matmul %60, %97, %cst_27 {dimension_numbers = #tpu.dot_dimension_numbers<[1], [0], [0], [1], [0, 0, 1, 1], [], []>} : vector<8x72xbf16>, vector<72x512xbf16>, vector<8x512xf32> -> vector<8x512xf32>
    %99 = vector.broadcast %8 : vector<8x1xf32> to vector<8x512xf32>
    %100 = arith.mulf %98, %99 : vector<8x512xf32>
    %101 = vector.broadcast %9 : vector<8x1xf32> to vector<8x512xf32>
    %102 = arith.addf %100, %101 : vector<8x512xf32>
    %103 = arith.addf %102, %4 : vector<8x512xf32>
    %cst_28 = arith.constant 0.000000e+00 : f32
    %cst_29 = arith.constant 1.000000e+01 : f32
    %104 = vector.broadcast %cst_28 : f32 to vector<8x512xf32>
    %105 = arith.maximumf %104, %103 : vector<8x512xf32>
    %106 = vector.broadcast %cst_29 : f32 to vector<8x512xf32>
    %107 = arith.minimumf %106, %105 : vector<8x512xf32>
    %cst_30 = arith.constant 1.500000e+00 : f32
    %108 = vector.broadcast %cst_30 : f32 to vector<8x512xf32>
    %109 = arith.mulf %107, %108 : vector<8x512xf32>
    %110 = math.roundeven %109 : vector<8x512xf32>
    %cst_31 = arith.constant 0.666666686 : f32
    %111 = vector.broadcast %cst_31 : f32 to vector<8x512xf32>
    %112 = arith.mulf %110, %111 : vector<8x512xf32>
    %113 = vector.extract_strided_slice %112 {offsets = [0, 0], sizes = [8, 256], strides = [1, 1]} : vector<8x512xf32> to vector<8x256xf32>
    %c0_32 = arith.constant 0 : index
    %c0_33 = arith.constant 0 : index
    %c0_34 = arith.constant 0 : index
    %114 = vector.load %arg6[%c0_32, %c0_33, %c0_34] : memref<2x8x256xf32, #tpu.memory_space<vmem>>, vector<1x8x256xf32>
    %115 = vector.shape_cast %114 : vector<1x8x256xf32> to vector<8x256xf32>
    %116 = vector.shape_cast %113 : vector<8x256xf32> to vector<1x8x256xf32>
    tpu.vector_store %arg6[%c0_32, %c0_33, %c0_34], %116 {strides = array<i32>} : memref<2x8x256xf32, #tpu.memory_space<vmem>>, vector<1x8x256xf32>,
    %117 = vector.extract_strided_slice %112 {offsets = [0, 256], sizes = [8, 256], strides = [1, 1]} : vector<8x512xf32> to vector<8x256xf32>
    %c1_35 = arith.constant 1 : index
    %c0_36 = arith.constant 0 : index
    %c0_37 = arith.constant 0 : index
    %118 = vector.load %arg6[%c1_35, %c0_36, %c0_37] : memref<2x8x256xf32, #tpu.memory_space<vmem>>, vector<1x8x256xf32>
    %119 = vector.shape_cast %118 : vector<1x8x256xf32> to vector<8x256xf32>
    %120 = vector.shape_cast %117 : vector<8x256xf32> to vector<1x8x256xf32>
    tpu.vector_store %arg6[%c1_35, %c0_36, %c0_37], %120 {strides = array<i32>} : memref<2x8x256xf32, #tpu.memory_space<vmem>>, vector<1x8x256xf32>,
    return
  }
  func.func @transform_0(%arg0: i32) -> (i32, i32, i32) {
    %c0_i32 = arith.constant 0 : i32
    %c0_i32_0 = arith.constant 0 : i32
    %c0_i32_1 = arith.constant 0 : i32
    return %arg0, %c0_i32, %c0_i32_0 : i32, i32, i32
  }
  func.func @transform_1(%arg0: i32) -> (i32, i32) {
    %c0_i32 = arith.constant 0 : i32
    %c0_i32_0 = arith.constant 0 : i32
    %c0_i32_1 = arith.constant 0 : i32
    return %c0_i32, %c0_i32_0 : i32, i32
  }
  func.func @transform_2(%arg0: i32) -> (i32, i32) {
    %c0_i32 = arith.constant 0 : i32
    %c0_i32_0 = arith.constant 0 : i32
    %c0_i32_1 = arith.constant 0 : i32
    return %c0_i32, %c0_i32_0 : i32, i32
  }
  func.func @transform_3(%arg0: i32) -> (i32, i32) {
    %c0_i32 = arith.constant 0 : i32
    %c0_i32_0 = arith.constant 0 : i32
    %c0_i32_1 = arith.constant 0 : i32
    return %c0_i32, %c0_i32_0 : i32, i32
  }
  func.func @transform_4(%arg0: i32) -> (i32, i32) {
    %c0_i32 = arith.constant 0 : i32
    %c0_i32_0 = arith.constant 0 : i32
    %c0_i32_1 = arith.constant 0 : i32
    return %c0_i32, %c0_i32_0 : i32, i32
  }
  func.func @transform_5(%arg0: i32) -> (i32, i32, i32) {
    %c0_i32 = arith.constant 0 : i32
    %c0_i32_0 = arith.constant 0 : i32
    %c0_i32_1 = arith.constant 0 : i32
    return %arg0, %c0_i32, %c0_i32_0 : i32, i32, i32
  }
}

</mosaic_0001>

<llo_original>
// kernel: basic_block_forward.1
$region0: #{basic_block_forward.1}
  #allocation0 [shape = 'u32[]', space=smem, size = 0x4, offset = 0x4, fixed_abs, tag = 'smem constant byte address 0x4 - core index']
  #allocation1 [shape = 'u32[144,128]{1,0:T(1,128)}', space=vmem, size = 0x12000, scoped, tag = 'internal scratch']
  %s0 = inlined_call_operand.vmem [shape: f32[8,8,256], index: 0, kind: input, shape index: {}]
  %s1 = inlined_call_operand.vmem [shape: bf16[8,72], index: 1, kind: input, shape index: {}]
  %s2 = inlined_call_operand.vmem [shape: bf16[8,72], index: 2, kind: input, shape index: {}]
  %s3 = inlined_call_operand.vmem [shape: f32[8,4], index: 3, kind: input, shape index: {}]
  %s4 = inlined_call_operand.vmem [shape: f32[9,512], index: 4, kind: input, shape index: {}]
  %s5 = inlined_call_operand.vmem [shape: f32[8,8,256], index: 5, kind: output, shape index: {}]
  %s6 = sld [smem:[#allocation0]]
  $region53: #{basic_block_forward.1} parent=0
    _
  %s8 = ssub.s32 1, %s6
  %s9 = scalar_select 0, %s8, %s6
  loop: start=0, step=1, limit=6
  $region2: #{basic_block_forward.1} parent=0 // loop_pre_header
    _
  $region3: #{basic_block_forward.1} parent=0 // loop_header
    %s11 = sphi 0, %s15
    %p12 = scmp.ge.s32.totalorder %s11, 6
    %s21 = sphi 0, %s23
    %s24 = sphi 0, %s21
    %s25 = sphi 0, %s24
    %s41 = sphi 0, %s25
    %s45 = sphi 0, %s45
    %s47 = sphi 0, %s45
    %s48 = sphi 0, %s47
    %s62 = sphi 0, %s48
    %s66 = sphi 0, %s66
    %s68 = sphi 0, %s66
    %s69 = sphi 0, %s68
    %s83 = sphi 0, %s69
    %s87 = sphi 0, %s87
    %s89 = sphi 0, %s87
    %s90 = sphi 0, %s89
    %s104 = sphi 0, %s90
    %s108 = sphi 0, %s108
    %s110 = sphi 0, %s108
    %s111 = sphi 0, %s110
    %s125 = sphi 0, %s111
    %s131 = sphi 0, %s133
    %s134 = sphi 0, %s131
    %s135 = sphi 0, %s134
    %s151 = sphi 0, %s135
  $region4: #{basic_block_forward.1} parent=0 // loop_header_branch
    %14 = sbr.rel (%p12) target = $region8
  $region5: #{basic_block_forward.1} parent=0 // loop_body
    %s16 = ssub.s32 %s11, 1
    %s17 = ssub.s32 %s11, 2
    %s18 = sadd.s32 %s11, 1
    %s19 = ssub.s32 %s11, %s18
    %p20 = scmp.eq.s32.totalorder %s19, 0
    %s22 = sadd.s32 %s21, 1
    %s23 = scalar_select %p20, %s21, %s22
    %p26 = pneg %p20
    %p27 = scmp.eq.s32.totalorder %s11, 3
    %p28 = por %p26, %p27
    %p29 = scmp.ne.s32.totalorder %s21, %s24
    %p30 = scmp.eq.s32.totalorder %s11, 0
    %p31 = por %p29, %p30
    %p32 = scmp.ne.s32.totalorder %s21, %s24
    %p33 = scmp.eq.s32.totalorder %s16, 3
    %p34 = por %p32, %p33
    %p35 = scmp.ne.s32.totalorder %s24, %s25
    %p36 = scmp.eq.s32.totalorder %s16, 0
    %p37 = por %p35, %p36
    %p38 = scmp.ne.s32.totalorder %s24, %s25
    %p39 = scmp.eq.s32.totalorder %s17, 3
    %p40 = por %p38, %p39
    %p42 = scmp.ne.s32.totalorder %s25, %s41
    %p43 = scmp.eq.s32.totalorder %s17, 0
    %p44 = por %p42, %p43
    %s46 = sadd.s32 %s45, 1
    %p49 = scmp.eq.s32.totalorder %s11, 3
    %p50 = scmp.ne.s32.totalorder %s45, %s47
    %p51 = scmp.eq.s32.totalorder %s11, 0
    %p52 = por %p50, %p51
    %p53 = scmp.ne.s32.totalorder %s45, %s47
    %p54 = scmp.eq.s32.totalorder %s16, 3
    %p55 = por %p53, %p54
    %p56 = scmp.ne.s32.totalorder %s47, %s48
    %p57 = scmp.eq.s32.totalorder %s16, 0
    %p58 = por %p56, %p57
    %p59 = scmp.ne.s32.totalorder %s47, %s48
    %p60 = scmp.eq.s32.totalorder %s17, 3
    %p61 = por %p59, %p60
    %p63 = scmp.ne.s32.totalorder %s48, %s62
    %p64 = scmp.eq.s32.totalorder %s17, 0
    %p65 = por %p63, %p64
    %s67 = sadd.s32 %s66, 1
    %p70 = scmp.eq.s32.totalorder %s11, 3
    %p71 = scmp.ne.s32.totalorder %s66, %s68
    %p72 = scmp.eq.s32.totalorder %s11, 0
    %p73 = por %p71, %p72
    %p74 = scmp.ne.s32.totalorder %s66, %s68
    %p75 = scmp.eq.s32.totalorder %s16, 3
    %p76 = por %p74, %p75
    %p77 = scmp.ne.s32.totalorder %s68, %s69
    %p78 = scmp.eq.s32.totalorder %s16, 0
    %p79 = por %p77, %p78
    %p80 = scmp.ne.s32.totalorder %s68, %s69
    %p81 = scmp.eq.s32.totalorder %s17, 3
    %p82 = por %p80, %p81
    %p84 = scmp.ne.s32.totalorder %s69, %s83
    %p85 = scmp.eq.s32.totalorder %s17, 0
    %p86 = por %p84, %p85
    %s88 = sadd.s32 %s87, 1
    %p91 = scmp.eq.s32.totalorder %s11, 3
    %p92 = scmp.ne.s32.totalorder %s87, %s89
    %p93 = scmp.eq.s32.totalorder %s11, 0
    %p94 = por %p92, %p93
    %p95 = scmp.ne.s32.totalorder %s87, %s89
    %p96 = scmp.eq.s32.totalorder %s16, 3
    %p97 = por %p95, %p96
    %p98 = scmp.ne.s32.totalorder %s89, %s90
    %p99 = scmp.eq.s32.totalorder %s16, 0
    %p100 = por %p98, %p99
    %p101 = scmp.ne.s32.totalorder %s89, %s90
    %p102 = scmp.eq.s32.totalorder %s17, 3
    %p103 = por %p101, %p102
    %p105 = scmp.ne.s32.totalorder %s90, %s104
    %p106 = scmp.eq.s32.totalorder %s17, 0
    %p107 = por %p105, %p106
    %s109 = sadd.s32 %s108, 1
    %p112 = scmp.eq.s32.totalorder %s11, 3
    %p113 = scmp.ne.s32.totalorder %s108, %s110
    %p114 = scmp.eq.s32.totalorder %s11, 0
    %p115 = por %p113, %p114
    %p116 = scmp.ne.s32.totalorder %s108, %s110
    %p117 = scmp.eq.s32.totalorder %s16, 3
    %p118 = por %p116, %p117
    %p119 = scmp.ne.s32.totalorder %s110, %s111
    %p120 = scmp.eq.s32.totalorder %s16, 0
    %p121 = por %p119, %p120
    %p122 = scmp.ne.s32.totalorder %s110, %s111
    %p123 = scmp.eq.s32.totalorder %s17, 3
    %p124 = por %p122, %p123
    %p126 = scmp.ne.s32.totalorder %s111, %s125
    %p127 = scmp.eq.s32.totalorder %s17, 0
    %p128 = por %p126, %p127
    %s129 = ssub.s32 %s11, %s18
    %p130 = scmp.eq.s32.totalorder %s129, 0
    %s132 = sadd.s32 %s131, 1
    %s133 = scalar_select %p130, %s131, %s132
    %p136 = pneg %p130
    %p137 = scmp.eq.s32.totalorder %s11, 3
    %p138 = por %p136, %p137
    %p139 = scmp.ne.s32.totalorder %s131, %s134
    %p140 = scmp.eq.s32.totalorder %s11, 0
    %p141 = por %p139, %p140
    %p142 = scmp.ne.s32.totalorder %s131, %s134
    %p143 = scmp.eq.s32.totalorder %s16, 3
    %p144 = por %p142, %p143
    %p145 = scmp.ne.s32.totalorder %s134, %s135
    %p146 = scmp.eq.s32.totalorder %s16, 0
    %p147 = por %p145, %p146
    %p148 = scmp.ne.s32.totalorder %s134, %s135
    %p149 = scmp.eq.s32.totalorder %s17, 3
    %p150 = por %p148, %p149
    %p152 = scmp.ne.s32.totalorder %s135, %s151
    %p153 = scmp.eq.s32.totalorder %s17, 0
    %p154 = por %p152, %p153
    %p155 = scmp.le.s32.totalorder 1, %s11
    %p156 = scmp.lt.s32.totalorder %s11, 5
    %p157 = pnand %p155, %p156
    %p158 = pneg %p157
    // Predicated region
    $region9: #{basic_block_forward.1} parent=5 // pred_check
      _
    $region10: #{basic_block_forward.1} parent=5 // pred_check_branch
      %160 = sbr.rel (%p157) target = $region12
    $region11: #{basic_block_forward.1} parent=5 // pred_region
      %s161 = ssub.s32 %s11, 1
      // Predicated region
      $region13: #{basic_block_forward.1} parent=11 // pred_check
        %p162 = pneg %p58
      $region14: #{basic_block_forward.1} parent=11 // pred_check_branch
        %164 = sbr.rel (%p162) target = $region16
      $region15: #{basic_block_forward.1} parent=11 // pred_region
        _
      $region16: #{basic_block_forward.1} parent=11 // pred_fallthru
        _
      // Predicated region
      $region17: #{basic_block_forward.1} parent=11 // pred_check
        %p165 = pneg %p79
      $region18: #{basic_block_forward.1} parent=11 // pred_check_branch
        %167 = sbr.rel (%p165) target = $region20
      $region19: #{basic_block_forward.1} parent=11 // pred_region
        _
      $region20: #{basic_block_forward.1} parent=11 // pred_fallthru
        _
      // Predicated region
      $region21: #{basic_block_forward.1} parent=11 // pred_check
        %p168 = pneg %p100
      $region22: #{basic_block_forward.1} parent=11 // pred_check_branch
        %170 = sbr.rel (%p168) target = $region24
      $region23: #{basic_block_forward.1} parent=11 // pred_region
        _
      $region24: #{basic_block_forward.1} parent=11 // pred_fallthru
        _
      // Predicated region
      $region25: #{basic_block_forward.1} parent=11 // pred_check
        %p171 = pneg %p121
      $region26: #{basic_block_forward.1} parent=11 // pred_check_branch
        %173 = sbr.rel (%p171) target = $region28
      $region27: #{basic_block_forward.1} parent=11 // pred_region
        _
      $region28: #{basic_block_forward.1} parent=11 // pred_fallthru
        _
    $region12: #{basic_block_forward.1} parent=5 // pred_fallthru
      _
    %p174 = scmp.lt.s32.totalorder %s11, 4
    // Predicated region
    $region29: #{basic_block_forward.1} parent=5 // pred_check
      %p175 = pneg %p174
    $region30: #{basic_block_forward.1} parent=5 // pred_check_branch
      %177 = sbr.rel (%p175) target = $region32
    $region31: #{basic_block_forward.1} parent=5 // pred_region
      // Predicated region
      $region33: #{basic_block_forward.1} parent=31 // pred_check
        %p178 = pneg %p31
      $region34: #{basic_block_forward.1} parent=31 // pred_check_branch
        %180 = sbr.rel (%p178) target = $region36
      $region35: #{basic_block_forward.1} parent=31 // pred_region
        %s181 = smul.u32 2, %s11
        %p182 = scmp.lt.s32.totalorder %s181, 7
        %s183 = scalar_select %p182, %s181, 7
        %s184 = smul.addr %s183, 2
        %s185 = smul.addr %s184, 8
        %s186 = scalar_lea.vmem %s0, %s185
        %s187 = smul.u32 2, %s11
      $region36: #{basic_block_forward.1} parent=31 // pred_fallthru
        _
    $region32: #{basic_block_forward.1} parent=5 // pred_fallthru
      _
    %p188 = scmp.le.s32.totalorder 1, %s11
    %p189 = scmp.lt.s32.totalorder %s11, 5
    %p190 = pnand %p188, %p189
    %p191 = pneg %p190
    // Predicated region
    $region37: #{basic_block_forward.1} parent=5 // pred_check
      _
    $region38: #{basic_block_forward.1} parent=5 // pred_check_branch
      %193 = sbr.rel (%p190) target = $region40
    $region39: #{basic_block_forward.1} parent=5 // pred_region
      %s194 = ssub.s32 %s11, 1
      %s195 = smul.u32 2, %s16
      %p196 = scmp.lt.s32.totalorder %s195, 7
      %s197 = scalar_select %p196, %s195, 7
      %s198 = smul.addr %s197, 2
      %s199 = smul.addr %s198, 8
      %s200 = scalar_lea.vmem %s0, %s199
      %p201 = pneg %p37
      %p202 = pneg %p34
      %p203 = pneg %p58
      %p204 = pneg %p55
      %p205 = pneg %p79
      %p206 = pneg %p76
      %p207 = pneg %p100
      %p208 = pneg %p97
      %p209 = pneg %p121
      %p210 = pneg %p118
      %p211 = pneg %p147
      %p212 = pneg %p144
      %s213 = smul.u32 2, %s16
      %p214 = scmp.lt.s32.totalorder %s213, 7
      %s215 = scalar_select %p214, %s213, 7
      %s216 = smul.addr %s215, 2
      %s217 = smul.addr %s216, 8
      %s218 = scalar_lea.vmem %s5, %s217
      %s219 = smul.u32 2, %s16
      %p220 = scmp.lt.s32.totalorder %s219, 7
      %s221 = scalar_select %p220, %s219, 7
      %s222 = smul.addr %s221, 2
      %s223 = smul.addr %s222, 8
      %s224 = scalar_lea.vmem %s0, %s223
      %s225 = smul.u32 2, %s16
      %s226 = smul.u32 2, %s16
      %p227 = scmp.lt.s32.totalorder %s226, 7
      %s228 = scalar_select %p227, %s226, 7
      %s229 = smul.addr %s228, 2
      %s230 = smul.addr %s229, 8
      %s231 = scalar_lea.vmem %s5, %s230
      %s232 = smul.u32 2, %s16
      %v234 = vld [vmem:[%s224] sm:$0xff]
      %v235 = vld [vmem:[%s224 + $0x8] sm:$0xff]
      %s236 = scalar_lea.vmem %s224, 16
      %v237 = vld [vmem:[%s236] sm:$0xff]
      %v238 = vld [vmem:[%s236 + $0x8] sm:$0xff]
      %v239 = vld [vmem:[%s4] sm:$0xff]
      %v240 = vld [vmem:[%s4 + $0x8] sm:$0xff]
      %v241 = vld [vmem:[%s4 + $0x10] sm:$0xff]
      %v242 = vld [vmem:[%s4 + $0x18] sm:$0xff]
      %v243 = vld [vmem:[%s4 + $0x20] sm:$0x1]
      %v244 = vld [vmem:[%s4 + $0x28] sm:$0x1]
      %v245 = vld [vmem:[%s4 + $0x30] sm:$0x1]
      %v246 = vld [vmem:[%s4 + $0x38] sm:$0x1]
      %v247 = vld [vmem:[%s3] sm:$0xff]
      %v248 = vld [vmem:[%s1] sm:$0xf]
      %249 = vrot.lane.b32.xlu0 %v234, 17
      %v250 = vpop.permute.xlu0 %249
      %251 = vrot.lane.b32.xlu0 %v235, 17
      %v252 = vpop.permute.xlu0 %251
      %253 = vrot.lane.b32.xlu0 %v237, 17
      %v254 = vpop.permute.xlu0 %253
      %255 = vrot.lane.b32.xlu0 %v238, 17
      %v256 = vpop.permute.xlu0 %255
      %v257 = vlaneseq
      %v258 = vand.u32 %v257, 127
      %vm259 = vcmp.lt.s32.totalorder %v258, 17
      %v260 = vsel %vm259, %v254, %v256
      %v261 = vsel %vm259, %v252, %v254
      %v262 = vsel %vm259, %v250, %v252
      %v263 = vsel %vm259, %v256, %v250
      %v264 = vlaneseq
      %v265 = vshrl.u32 %v264, 7
      %v266 = vsub.s32 0, %v265
      %v267 = vrot.slane %v239, %v266
      %v268 = vlaneseq
      %v269 = vshrl.u32 %v268, 7
      %v270 = vsub.s32 0, %v269
      %v271 = vrot.slane %v240, %v270
      %v272 = vlaneseq
      %v273 = vshrl.u32 %v272, 7
      %v274 = vsub.s32 0, %v273
      %v275 = vrot.slane %v241, %v274
      %v276 = vlaneseq
      %v277 = vshrl.u32 %v276, 7
      %v278 = vsub.s32 0, %v277
      %v279 = vrot.slane %v242, %v278
      %v280 = vmul.f32 %v263, %v267
      %v281 = vmul.f32 %v262, %v271
      %v282 = vmul.f32 %v261, %v275
      %v283 = vmul.f32 %v260, %v279
      %284 = vrot.lane.b32.xlu0 %v234, 16
      %v285 = vpop.permute.xlu0 %284
      %286 = vrot.lane.b32.xlu0 %v235, 16
      %v287 = vpop.permute.xlu0 %286
      %288 = vrot.lane.b32.xlu0 %v237, 16
      %v289 = vpop.permute.xlu0 %288
      %290 = vrot.lane.b32.xlu0 %v238, 16
      %v291 = vpop.permute.xlu0 %290
      %vm292 = vcmp.lt.s32.totalorder %v258, 16
      %v293 = vsel %vm292, %v289, %v291
      %v294 = vsel %vm292, %v287, %v289
      %v295 = vsel %vm292, %v285, %v287
      %v296 = vsel %vm292, %v291, %v285
      %v297 = vlaneseq
      %v298 = vshrl.u32 %v297, 7
      %v299 = vsub.s32 1, %v298
      %v300 = vrot.slane %v239, %v299
      %v301 = vlaneseq
      %v302 = vshrl.u32 %v301, 7
      %v303 = vsub.s32 1, %v302
      %v304 = vrot.slane %v240, %v303
      %v305 = vlaneseq
      %v306 = vshrl.u32 %v305, 7
      %v307 = vsub.s32 1, %v306
      %v308 = vrot.slane %v241, %v307
      %v309 = vlaneseq
      %v310 = vshrl.u32 %v309, 7
      %v311 = vsub.s32 1, %v310
      %v312 = vrot.slane %v242, %v311
      %v313 = vmul.f32 %v296, %v300
      %v314 = vmul.f32 %v295, %v304
      %v315 = vmul.f32 %v294, %v308
      %v316 = vmul.f32 %v293, %v312
      %317 = vrot.lane.b32.xlu0 %v234, 15
      %v318 = vpop.permute.xlu0 %317
      %319 = vrot.lane.b32.xlu0 %v235, 15
      %v320 = vpop.permute.xlu0 %319
      %321 = vrot.lane.b32.xlu0 %v237, 15
      %v322 = vpop.permute.xlu0 %321
      %323 = vrot.lane.b32.xlu0 %v238, 15
      %v324 = vpop.permute.xlu0 %323
      %vm325 = vcmp.lt.s32.totalorder %v258, 15
      %v326 = vsel %vm325, %v322, %v324
      %v327 = vsel %vm325, %v320, %v322
      %v328 = vsel %vm325, %v318, %v320
      %v329 = vsel %vm325, %v324, %v318
      %v330 = vlaneseq
      %v331 = vshrl.u32 %v330, 7
      %v332 = vsub.s32 2, %v331
      %v333 = vrot.slane %v239, %v332
      %v334 = vlaneseq
      %v335 = vshrl.u32 %v334, 7
      %v336 = vsub.s32 2, %v335
      %v337 = vrot.slane %v240, %v336
      %v338 = vlaneseq
      %v339 = vshrl.u32 %v338, 7
      %v340 = vsub.s32 2, %v339
      %v341 = vrot.slane %v241, %v340
      %v342 = vlaneseq
      %v343 = vshrl.u32 %v342, 7
      %v344 = vsub.s32 2, %v343
      %v345 = vrot.slane %v242, %v344
      %v346 = vmul.f32 %v329, %v333
      %v347 = vmul.f32 %v328, %v337
      %v348 = vmul.f32 %v327, %v341
      %v349 = vmul.f32 %v326, %v345
      %350 = vrot.lane.b32.xlu0 %v234, 1
      %v351 = vpop.permute.xlu0 %350
      %352 = vrot.lane.b32.xlu0 %v235, 1
      %v353 = vpop.permute.xlu0 %352
      %354 = vrot.lane.b32.xlu0 %v237, 1
      %v355 = vpop.permute.xlu0 %354
      %356 = vrot.lane.b32.xlu0 %v238, 1
      %v357 = vpop.permute.xlu0 %356
      %vm358 = vcmp.lt.s32.totalorder %v258, 1
      %v359 = vsel %vm358, %v355, %v357
      %v360 = vsel %vm358, %v353, %v355
      %v361 = vsel %vm358, %v351, %v353
      %v362 = vsel %vm358, %v357, %v351
      %v363 = vlaneseq
      %v364 = vshrl.u32 %v363, 7
      %v365 = vsub.s32 3, %v364
      %v366 = vrot.slane %v239, %v365
      %v367 = vlaneseq
      %v368 = vshrl.u32 %v367, 7
      %v369 = vsub.s32 3, %v368
      %v370 = vrot.slane %v240, %v369
      %v371 = vlaneseq
      %v372 = vshrl.u32 %v371, 7
      %v373 = vsub.s32 3, %v372
      %v374 = vrot.slane %v241, %v373
      %v375 = vlaneseq
      %v376 = vshrl.u32 %v375, 7
      %v377 = vsub.s32 3, %v376
      %v378 = vrot.slane %v242, %v377
      %v379 = vmul.f32 %v362, %v366
      %v380 = vmul.f32 %v361, %v370
      %v381 = vmul.f32 %v360, %v374
      %v382 = vmul.f32 %v359, %v378
      %v383 = vlaneseq
      %v384 = vshrl.u32 %v383, 7
      %v385 = vsub.s32 4, %v384
      %v386 = vrot.slane %v239, %v385
      %v387 = vlaneseq
      %v388 = vshrl.u32 %v387, 7
      %v389 = vsub.s32 4, %v388
      %v390 = vrot.slane %v240, %v389
      %v391 = vlaneseq
      %v392 = vshrl.u32 %v391, 7
      %v393 = vsub.s32 4, %v392
      %v394 = vrot.slane %v241, %v393
      %v395 = vlaneseq
      %v396 = vshrl.u32 %v395, 7
      %v397 = vsub.s32 4, %v396
      %v398 = vrot.slane %v242, %v397
      %v399 = vmul.f32 %v234, %v386
      %v400 = vmul.f32 %v235, %v390
      %v401 = vmul.f32 %v237, %v394
      %v402 = vmul.f32 %v238, %v398
      %403 = vrot.lane.b32.xlu0 %v234, 127
      %v404 = vpop.permute.xlu0 %403
      %405 = vrot.lane.b32.xlu0 %v235, 127
      %v406 = vpop.permute.xlu0 %405
      %407 = vrot.lane.b32.xlu0 %v237, 127
      %v408 = vpop.permute.xlu0 %407
      %409 = vrot.lane.b32.xlu0 %v238, 127
      %v410 = vpop.permute.xlu0 %409
      %vm411 = vcmp.lt.s32.totalorder %v258, 127
      %v412 = vsel %vm411, %v408, %v410
      %v413 = vsel %vm411, %v406, %v408
      %v414 = vsel %vm411, %v404, %v406
      %v415 = vsel %vm411, %v410, %v404
      %v416 = vlaneseq
      %v417 = vshrl.u32 %v416, 7
      %v418 = vsub.s32 5, %v417
      %v419 = vrot.slane %v239, %v418
      %v420 = vlaneseq
      %v421 = vshrl.u32 %v420, 7
      %v422 = vsub.s32 5, %v421
      %v423 = vrot.slane %v240, %v422
      %v424 = vlaneseq
      %v425 = vshrl.u32 %v424, 7
      %v426 = vsub.s32 5, %v425
      %v427 = vrot.slane %v241, %v426
      %v428 = vlaneseq
      %v429 = vshrl.u32 %v428, 7
      %v430 = vsub.s32 5, %v429
      %v431 = vrot.slane %v242, %v430
      %v432 = vmul.f32 %v414, %v419
      %v433 = vmul.f32 %v413, %v423
      %v434 = vmul.f32 %v412, %v427
      %v435 = vmul.f32 %v415, %v431
      %436 = vrot.lane.b32.xlu0 %v234, 113
      %v437 = vpop.permute.xlu0 %436
      %438 = vrot.lane.b32.xlu0 %v235, 113
      %v439 = vpop.permute.xlu0 %438
      %440 = vrot.lane.b32.xlu0 %v237, 113
      %v441 = vpop.permute.xlu0 %440
      %442 = vrot.lane.b32.xlu0 %v238, 113
      %v443 = vpop.permute.xlu0 %442
      %vm444 = vcmp.lt.s32.totalorder %v258, 113
      %v445 = vsel %vm444, %v441, %v443
      %v446 = vsel %vm444, %v439, %v441
      %v447 = vsel %vm444, %v437, %v439
      %v448 = vsel %vm444, %v443, %v437
      %v449 = vlaneseq
      %v450 = vshrl.u32 %v449, 7
      %v451 = vsub.s32 6, %v450
      %v452 = vrot.slane %v239, %v451
      %v453 = vlaneseq
      %v454 = vshrl.u32 %v453, 7
      %v455 = vsub.s32 6, %v454
      %v456 = vrot.slane %v240, %v455
      %v457 = vlaneseq
      %v458 = vshrl.u32 %v457, 7
      %v459 = vsub.s32 6, %v458
      %v460 = vrot.slane %v241, %v459
      %v461 = vlaneseq
      %v462 = vshrl.u32 %v461, 7
      %v463 = vsub.s32 6, %v462
      %v464 = vrot.slane %v242, %v463
      %v465 = vmul.f32 %v447, %v452
      %v466 = vmul.f32 %v446, %v456
      %v467 = vmul.f32 %v445, %v460
      %v468 = vmul.f32 %v448, %v464
      %469 = vrot.lane.b32.xlu0 %v234, 112
      %v470 = vpop.permute.xlu0 %469
      %471 = vrot.lane.b32.xlu0 %v235, 112
      %v472 = vpop.permute.xlu0 %471
      %473 = vrot.lane.b32.xlu0 %v237, 112
      %v474 = vpop.permute.xlu0 %473
      %475 = vrot.lane.b32.xlu0 %v238, 112
      %v476 = vpop.permute.xlu0 %475
      %vm477 = vcmp.lt.s32.totalorder %v258, 112
      %v478 = vsel %vm477, %v474, %v476
      %v479 = vsel %vm477, %v472, %v474
      %v480 = vsel %vm477, %v470, %v472
      %v481 = vsel %vm477, %v476, %v470
      %v482 = vlaneseq
      %v483 = vshrl.u32 %v482, 7
      %v484 = vsub.s32 7, %v483
      %v485 = vrot.slane %v239, %v484
      %v486 = vlaneseq
      %v487 = vshrl.u32 %v486, 7
      %v488 = vsub.s32 7, %v487
      %v489 = vrot.slane %v240, %v488
      %v490 = vlaneseq
      %v491 = vshrl.u32 %v490, 7
      %v492 = vsub.s32 7, %v491
      %v493 = vrot.slane %v241, %v492
      %v494 = vlaneseq
      %v495 = vshrl.u32 %v494, 7
      %v496 = vsub.s32 7, %v495
      %v497 = vrot.slane %v242, %v496
      %v498 = vmul.f32 %v480, %v485
      %v499 = vmul.f32 %v479, %v489
      %v500 = vmul.f32 %v478, %v493
      %v501 = vmul.f32 %v481, %v497
      %502 = vrot.lane.b32.xlu0 %v234, 111
      %v503 = vpop.permute.xlu0 %502
      %504 = vrot.lane.b32.xlu0 %v235, 111
      %v505 = vpop.permute.xlu0 %504
      %506 = vrot.lane.b32.xlu0 %v237, 111
      %v507 = vpop.permute.xlu0 %506
      %508 = vrot.lane.b32.xlu0 %v238, 111
      %v509 = vpop.permute.xlu0 %508
      %vm510 = vcmp.lt.s32.totalorder %v258, 111
      %v511 = vsel %vm510, %v507, %v509
      %v512 = vsel %vm510, %v505, %v507
      %v513 = vsel %vm510, %v503, %v505
      %v514 = vsel %vm510, %v509, %v503
      %v515 = vlaneseq
      %v516 = vshrl.u32 %v515, 7
      %v517 = vsub.s32 0, %v516
      %v518 = vrot.slane %v243, %v517
      %v519 = vlaneseq
      %v520 = vshrl.u32 %v519, 7
      %v521 = vsub.s32 0, %v520
      %v522 = vrot.slane %v244, %v521
      %v523 = vlaneseq
      %v524 = vshrl.u32 %v523, 7
      %v525 = vsub.s32 0, %v524
      %v526 = vrot.slane %v245, %v525
      %v527 = vlaneseq
      %v528 = vshrl.u32 %v527, 7
      %v529 = vsub.s32 0, %v528
      %v530 = vrot.slane %v246, %v529
      %v531 = vmul.f32 %v513, %v518
      %v532 = vmul.f32 %v512, %v522
      %v533 = vmul.f32 %v511, %v526
      %v534 = vmul.f32 %v514, %v530
      %v535 = vpack.c.bf16 %v313, %v280
      %v536 = vpack.c.bf16 %v314, %v281
      %v537 = vpack.c.bf16 %v315, %v282
      %v538 = vpack.c.bf16 %v316, %v283
      %v539 = vpack.c.bf16 %v379, %v346
      %v540 = vpack.c.bf16 %v380, %v347
      %v541 = vpack.c.bf16 %v381, %v348
      %v542 = vpack.c.bf16 %v382, %v349
      %v543 = vpack.c.bf16 %v432, %v399
      %v544 = vpack.c.bf16 %v433, %v400
      %v545 = vpack.c.bf16 %v434, %v401
      %v546 = vpack.c.bf16 %v435, %v402
      %v547 = vpack.c.bf16 %v498, %v465
      %v548 = vpack.c.bf16 %v499, %v466
      %v549 = vpack.c.bf16 %v500, %v467
      %v550 = vpack.c.bf16 %v501, %v468
      %v551 = vpack.c.bf16 %v531, %v531
      %v552 = vpack.c.bf16 %v532, %v532
      %v553 = vpack.c.bf16 %v533, %v533
      %v554 = vpack.c.bf16 %v534, %v534
      %vm555 = vcmask 588800
      %v557 = vsel %vm555, %v248, 0
      %vm559 = vcmask 1043456
      %v561 = vsel %vm559, %v551, 0
      %v564 = vsel %vm559, %v552, 0
      %v567 = vsel %vm559, %v553, 0
      %v570 = vsel %vm559, %v554, 0
      %572 = vmatprep.subr.bf16.mxu0 %v536
      %573 = vmatpush1.bf16.msra.mxu0 %v535
      %574 = vmatprep.subr.bf16.mxu0 %v540
      %575 = vmatpush1.bf16.msra.mxu0 %v539
      %576 = vmatprep.subr.bf16.mxu0 %v544
      %577 = vmatpush1.bf16.msra.mxu0 %v543
      %578 = vmatprep.subr.bf16.mxu0 %v548
      %579 = vmatpush1.bf16.msra.mxu0 %v547
      %580 = vmatprep.subr.bf16.mxu0 %v564
      %581 = vmatpush1.bf16.msra.mxu0 %v561
      %582 = vmatprep.subr.bf16.mxu0 0
      %583 = vmatpush1.bf16.msra.mxu0 0
      %584 = vmatprep.subr.bf16.mxu0 0
      %585 = vmatpush1.bf16.msra.mxu0 0
      %586 = vmatprep.subr.bf16.mxu0 0
      %587 = vmatpush1.bf16.msra.mxu0 0
      %588 = vmatprep.subr.bf16.mxu0 0
      %589 = vmatpush1.bf16.msra.mxu0 0
      %590 = vmatprep.subr.bf16.mxu0 0
      %591 = vmatpush1.bf16.msra.mxu0 0
      %592 = vmatprep.subr.bf16.mxu0 0
      %593 = vmatpush1.bf16.msra.mxu0 0
      %594 = vmatprep.subr.bf16.mxu0 0
      %595 = vmatpush1.bf16.msra.mxu0 0
      %596 = vmatprep.subr.bf16.mxu0 0
      %597 = vmatpush1.bf16.msra.mxu0 0
      %598 = vmatprep.subr.bf16.mxu0 0
      %599 = vmatpush1.bf16.msra.mxu0 0
      %600 = vmatprep.subr.bf16.mxu0 0
      %601 = vmatpush1.bf16.msra.mxu0 0
      %602 = vmatprep.subr.bf16.mxu0 0
      %603 = vmatpush1.bf16.msra.mxu0 0
      %604 = vmatprep.mubr.bf16.mxu0 0
      %605 = vmatmul.mubr.bf16.gmra.mrb[0].mxu0 %v557
      %v606 = vpop.f32.mrb[0].mxu0
      %v607 = vadd.f32 0.0, %v606
      %v608 = vpop.f32.mrb[0].mxu0
      %v609 = vadd.f32 0.0, %v608
      %v610 = vpop.f32.mrb[0].mxu0
      %v611 = vpop.f32.mrb[0].mxu0
      %612 = vdwg.mxu0
      %613 = vmatprep.subr.bf16.mxu0 %v538
      %614 = vmatpush1.bf16.msra.mxu0 %v537
      %615 = vmatprep.subr.bf16.mxu0 %v542
      %616 = vmatpush1.bf16.msra.mxu0 %v541
      %617 = vmatprep.subr.bf16.mxu0 %v546
      %618 = vmatpush1.bf16.msra.mxu0 %v545
      %619 = vmatprep.subr.bf16.mxu0 %v550
      %620 = vmatpush1.bf16.msra.mxu0 %v549
      %621 = vmatprep.subr.bf16.mxu0 %v570
      %622 = vmatpush1.bf16.msra.mxu0 %v567
      %623 = vmatprep.subr.bf16.mxu0 0
      %624 = vmatpush1.bf16.msra.mxu0 0
      %625 = vmatprep.subr.bf16.mxu0 0
      %626 = vmatpush1.bf16.msra.mxu0 0
      %627 = vmatprep.subr.bf16.mxu0 0
      %628 = vmatpush1.bf16.msra.mxu0 0
      %629 = vmatprep.subr.bf16.mxu0 0
      %630 = vmatpush1.bf16.msra.mxu0 0
      %631 = vmatprep.subr.bf16.mxu0 0
      %632 = vmatpush1.bf16.msra.mxu0 0
      %633 = vmatprep.subr.bf16.mxu0 0
      %634 = vmatpush1.bf16.msra.mxu0 0
      %635 = vmatprep.subr.bf16.mxu0 0
      %636 = vmatpush1.bf16.msra.mxu0 0
      %637 = vmatprep.subr.bf16.mxu0 0
      %638 = vmatpush1.bf16.msra.mxu0 0
      %639 = vmatprep.subr.bf16.mxu0 0
      %640 = vmatpush1.bf16.msra.mxu0 0
      %641 = vmatprep.subr.bf16.mxu0 0
      %642 = vmatpush1.bf16.msra.mxu0 0
      %643 = vmatprep.subr.bf16.mxu0 0
      %644 = vmatpush1.bf16.msra.mxu0 0
      %645 = vmatprep.mubr.bf16.mxu0 0
      %646 = vmatmul.mubr.bf16.gmra.mrb[0].mxu0 %v557
      %v647 = vpop.f32.mrb[0].mxu0
      %v648 = vadd.f32 0.0, %v647
      %v649 = vpop.f32.mrb[0].mxu0
      %v650 = vadd.f32 0.0, %v649
      %v651 = vpop.f32.mrb[0].mxu0
      %v652 = vpop.f32.mrb[0].mxu0
      %653 = vdwg.mxu0
      %655 = vset.pattern.permute.xlu0 0
      %656 = vperm.xlu0 %655, %v247
      %v657 = vpop.permute.xlu0 %656
      %v659 = vmul.f32 %v607, %v657
      %v660 = vmul.f32 %v609, %v657
      %v661 = vmul.f32 %v648, %v657
      %v662 = vmul.f32 %v650, %v657
      %663 = vset.pattern.permute.xlu0 1
      %664 = vperm.xlu0 %663, %v247
      %v665 = vpop.permute.xlu0 %664
      %v667 = vadd.f32 %v659, %v665
      %v668 = vadd.f32 %v660, %v665
      %v669 = vadd.f32 %v661, %v665
      %v670 = vadd.f32 %v662, %v665
      %v671 = vmax.f32 %v667, 0.0
      %v672 = vmax.f32 %v668, 0.0
      %v673 = vmax.f32 %v669, 0.0
      %v674 = vmax.f32 %v670, 0.0
      %v675 = vmin.f32 %v671, 10.0
      %v676 = vmin.f32 %v672, 10.0
      %v677 = vmin.f32 %v673, 10.0
      %v678 = vmin.f32 %v674, 10.0
      %v679 = vmul.f32 %v675, 1.5
      %v680 = vmul.f32 %v676, 1.5
      %v681 = vmul.f32 %v677, 1.5
      %v682 = vmul.f32 %v678, 1.5
      %v683 = vround.ne.pseudo %v679
      %v684 = vround.ne.pseudo %v680
      %v685 = vround.ne.pseudo %v681
      %v686 = vround.ne.pseudo %v682
      %v687 = vld [vmem:[%s2] sm:$0xf]
      %688 = vrot.lane.b32.xlu0 %v683, 17
      %v689 = vpop.permute.xlu0 %688
      %690 = vrot.lane.b32.xlu0 %v684, 17
      %v691 = vpop.permute.xlu0 %690
      %692 = vrot.lane.b32.xlu0 %v685, 17
      %v693 = vpop.permute.xlu0 %692
      %694 = vrot.lane.b32.xlu0 %v686, 17
      %v695 = vpop.permute.xlu0 %694
      %v696 = vsel %vm259, %v693, %v695
      %v697 = vsel %vm259, %v691, %v693
      %v698 = vsel %vm259, %v689, %v691
      %v699 = vsel %vm259, %v695, %v689
      %v700 = vmul.f32 %v699, %v267
      %v701 = vmul.f32 %v698, %v271
      %v702 = vmul.f32 %v697, %v275
      %v703 = vmul.f32 %v696, %v279
      %704 = vrot.lane.b32.xlu0 %v683, 16
      %v705 = vpop.permute.xlu0 %704
      %706 = vrot.lane.b32.xlu0 %v684, 16
      %v707 = vpop.permute.xlu0 %706
      %708 = vrot.lane.b32.xlu0 %v685, 16
      %v709 = vpop.permute.xlu0 %708
      %710 = vrot.lane.b32.xlu0 %v686, 16
      %v711 = vpop.permute.xlu0 %710
      %v712 = vsel %vm292, %v709, %v711
      %v713 = vsel %vm292, %v707, %v709
      %v714 = vsel %vm292, %v705, %v707
      %v715 = vsel %vm292, %v711, %v705
      %v716 = vmul.f32 %v715, %v300
      %v717 = vmul.f32 %v714, %v304
      %v718 = vmul.f32 %v713, %v308
      %v719 = vmul.f32 %v712, %v312
      %720 = vrot.lane.b32.xlu0 %v683, 15
      %v721 = vpop.permute.xlu0 %720
      %722 = vrot.lane.b32.xlu0 %v684, 15
      %v723 = vpop.permute.xlu0 %722
      %724 = vrot.lane.b32.xlu0 %v685, 15
      %v725 = vpop.permute.xlu0 %724
      %726 = vrot.lane.b32.xlu0 %v686, 15
      %v727 = vpop.permute.xlu0 %726
      %v728 = vsel %vm325, %v725, %v727
      %v729 = vsel %vm325, %v723, %v725
      %v730 = vsel %vm325, %v721, %v723
      %v731 = vsel %vm325, %v727, %v721
      %v732 = vmul.f32 %v731, %v333
      %v733 = vmul.f32 %v730, %v337
      %v734 = vmul.f32 %v729, %v341
      %v735 = vmul.f32 %v728, %v345
      %736 = vrot.lane.b32.xlu0 %v683, 1
      %v737 = vpop.permute.xlu0 %736
      %738 = vrot.lane.b32.xlu0 %v684, 1
      %v739 = vpop.permute.xlu0 %738
      %740 = vrot.lane.b32.xlu0 %v685, 1
      %v741 = vpop.permute.xlu0 %740
      %742 = vrot.lane.b32.xlu0 %v686, 1
      %v743 = vpop.permute.xlu0 %742
      %v744 = vsel %vm358, %v741, %v743
      %v745 = vsel %vm358, %v739, %v741
      %v746 = vsel %vm358, %v737, %v739
      %v747 = vsel %vm358, %v743, %v737
      %v748 = vmul.f32 %v747, %v366
      %v749 = vmul.f32 %v746, %v370
      %v750 = vmul.f32 %v745, %v374
      %v751 = vmul.f32 %v744, %v378
      %v752 = vmul.f32 %v683, %v386
      %v753 = vmul.f32 %v684, %v390
      %v754 = vmul.f32 %v685, %v394
      %v755 = vmul.f32 %v686, %v398
      %756 = vrot.lane.b32.xlu0 %v683, 127
      %v757 = vpop.permute.xlu0 %756
      %758 = vrot.lane.b32.xlu0 %v684, 127
      %v759 = vpop.permute.xlu0 %758
      %760 = vrot.lane.b32.xlu0 %v685, 127
      %v761 = vpop.permute.xlu0 %760
      %762 = vrot.lane.b32.xlu0 %v686, 127
      %v763 = vpop.permute.xlu0 %762
      %v764 = vsel %vm411, %v761, %v763
      %v765 = vsel %vm411, %v759, %v761
      %v766 = vsel %vm411, %v757, %v759
      %v767 = vsel %vm411, %v763, %v757
      %v768 = vmul.f32 %v766, %v419
      %v769 = vmul.f32 %v765, %v423
      %v770 = vmul.f32 %v764, %v427
      %v771 = vmul.f32 %v767, %v431
      %772 = vrot.lane.b32.xlu0 %v683, 113
      %v773 = vpop.permute.xlu0 %772
      %774 = vrot.lane.b32.xlu0 %v684, 113
      %v775 = vpop.permute.xlu0 %774
      %776 = vrot.lane.b32.xlu0 %v685, 113
      %v777 = vpop.permute.xlu0 %776
      %778 = vrot.lane.b32.xlu0 %v686, 113
      %v779 = vpop.permute.xlu0 %778
      %v780 = vsel %vm444, %v777, %v779
      %v781 = vsel %vm444, %v775, %v777
      %v782 = vsel %vm444, %v773, %v775
      %v783 = vsel %vm444, %v779, %v773
      %v784 = vmul.f32 %v782, %v452
      %v785 = vmul.f32 %v781, %v456
      %v786 = vmul.f32 %v780, %v460
      %v787 = vmul.f32 %v783, %v464
      %788 = vrot.lane.b32.xlu0 %v683, 112
      %v789 = vpop.permute.xlu0 %788
      %790 = vrot.lane.b32.xlu0 %v684, 112
      %v791 = vpop.permute.xlu0 %790
      %792 = vrot.lane.b32.xlu0 %v685, 112
      %v793 = vpop.permute.xlu0 %792
      %794 = vrot.lane.b32.xlu0 %v686, 112
      %v795 = vpop.permute.xlu0 %794
      %v796 = vsel %vm477, %v793, %v795
      %v797 = vsel %vm477, %v791, %v793
      %v798 = vsel %vm477, %v789, %v791
      %v799 = vsel %vm477, %v795, %v789
      %v800 = vmul.f32 %v798, %v485
      %v801 = vmul.f32 %v797, %v489
      %v802 = vmul.f32 %v796, %v493
      %v803 = vmul.f32 %v799, %v497
      %804 = vrot.lane.b32.xlu0 %v683, 111
      %v805 = vpop.permute.xlu0 %804
      %806 = vrot.lane.b32.xlu0 %v684, 111
      %v807 = vpop.permute.xlu0 %806
      %808 = vrot.lane.b32.xlu0 %v685, 111
      %v809 = vpop.permute.xlu0 %808
      %810 = vrot.lane.b32.xlu0 %v686, 111
      %v811 = vpop.permute.xlu0 %810
      %v812 = vsel %vm510, %v809, %v811
      %v813 = vsel %vm510, %v807, %v809
      %v814 = vsel %vm510, %v805, %v807
      %v815 = vsel %vm510, %v811, %v805
      %v816 = vmul.f32 %v814, %v518
      %v817 = vmul.f32 %v813, %v522
      %v818 = vmul.f32 %v812, %v526
      %v819 = vmul.f32 %v815, %v530
      %v820 = vpack.c.bf16 %v716, %v700
      %v821 = vpack.c.bf16 %v717, %v701
      %v822 = vpack.c.bf16 %v718, %v702
      %v823 = vpack.c.bf16 %v719, %v703
      %v824 = vpack.c.bf16 %v748, %v732
      %v825 = vpack.c.bf16 %v749, %v733
      %v826 = vpack.c.bf16 %v750, %v734
      %v827 = vpack.c.bf16 %v751, %v735
      %v828 = vpack.c.bf16 %v768, %v752
      %v829 = vpack.c.bf16 %v769, %v753
      %v830 = vpack.c.bf16 %v770, %v754
      %v831 = vpack.c.bf16 %v771, %v755
      %v832 = vpack.c.bf16 %v800, %v784
      %v833 = vpack.c.bf16 %v801, %v785
      %v834 = vpack.c.bf16 %v802, %v786
      %v835 = vpack.c.bf16 %v803, %v787
      %v836 = vpack.c.bf16 %v816, %v816
      %v837 = vpack.c.bf16 %v817, %v817
      %v838 = vpack.c.bf16 %v818, %v818
      %v839 = vpack.c.bf16 %v819, %v819
      %v841 = vsel %vm555, %v687, 0
      %v844 = vsel %vm559, %v836, 0
      %v847 = vsel %vm559, %v837, 0
      %v850 = vsel %vm559, %v838, 0
      %v853 = vsel %vm559, %v839, 0
      %855 = vmatprep.subr.bf16.mxu0 %v821
      %856 = vmatpush1.bf16.msra.mxu0 %v820
      %857 = vmatprep.subr.bf16.mxu0 %v825
      %858 = vmatpush1.bf16.msra.mxu0 %v824
      %859 = vmatprep.subr.bf16.mxu0 %v829
      %860 = vmatpush1.bf16.msra.mxu0 %v828
      %861 = vmatprep.subr.bf16.mxu0 %v833
      %862 = vmatpush1.bf16.msra.mxu0 %v832
      %863 = vmatprep.subr.bf16.mxu0 %v847
      %864 = vmatpush1.bf16.msra.mxu0 %v844
      %865 = vmatprep.subr.bf16.mxu0 0
      %866 = vmatpush1.bf16.msra.mxu0 0
      %867 = vmatprep.subr.bf16.mxu0 0
      %868 = vmatpush1.bf16.msra.mxu0 0
      %869 = vmatprep.subr.bf16.mxu0 0
      %870 = vmatpush1.bf16.msra.mxu0 0
      %871 = vmatprep.subr.bf16.mxu0 0
      %872 = vmatpush1.bf16.msra.mxu0 0
      %873 = vmatprep.subr.bf16.mxu0 0
      %874 = vmatpush1.bf16.msra.mxu0 0
      %875 = vmatprep.subr.bf16.mxu0 0
      %876 = vmatpush1.bf16.msra.mxu0 0
      %877 = vmatprep.subr.bf16.mxu0 0
      %878 = vmatpush1.bf16.msra.mxu0 0
      %879 = vmatprep.subr.bf16.mxu0 0
      %880 = vmatpush1.bf16.msra.mxu0 0
      %881 = vmatprep.subr.bf16.mxu0 0
      %882 = vmatpush1.bf16.msra.mxu0 0
      %883 = vmatprep.subr.bf16.mxu0 0
      %884 = vmatpush1.bf16.msra.mxu0 0
      %885 = vmatprep.subr.bf16.mxu0 0
      %886 = vmatpush1.bf16.msra.mxu0 0
      %887 = vmatprep.mubr.bf16.mxu0 0
      %888 = vmatmul.mubr.bf16.gmra.mrb[0].mxu0 %v841
      %v889 = vpop.f32.mrb[0].mxu0
      %v890 = vadd.f32 0.0, %v889
      %v891 = vpop.f32.mrb[0].mxu0
      %v892 = vadd.f32 0.0, %v891
      %v893 = vpop.f32.mrb[0].mxu0
      %v894 = vpop.f32.mrb[0].mxu0
      %895 = vdwg.mxu0
      %896 = vmatprep.subr.bf16.mxu0 %v823
      %897 = vmatpush1.bf16.msra.mxu0 %v822
      %898 = vmatprep.subr.bf16.mxu0 %v827
      %899 = vmatpush1.bf16.msra.mxu0 %v826
      %900 = vmatprep.subr.bf16.mxu0 %v831
      %901 = vmatpush1.bf16.msra.mxu0 %v830
      %902 = vmatprep.subr.bf16.mxu0 %v835
      %903 = vmatpush1.bf16.msra.mxu0 %v834
      %904 = vmatprep.subr.bf16.mxu0 %v853
      %905 = vmatpush1.bf16.msra.mxu0 %v850
      %906 = vmatprep.subr.bf16.mxu0 0
      %907 = vmatpush1.bf16.msra.mxu0 0
      %908 = vmatprep.subr.bf16.mxu0 0
      %909 = vmatpush1.bf16.msra.mxu0 0
      %910 = vmatprep.subr.bf16.mxu0 0
      %911 = vmatpush1.bf16.msra.mxu0 0
      %912 = vmatprep.subr.bf16.mxu0 0
      %913 = vmatpush1.bf16.msra.mxu0 0
      %914 = vmatprep.subr.bf16.mxu0 0
      %915 = vmatpush1.bf16.msra.mxu0 0
      %916 = vmatprep.subr.bf16.mxu0 0
      %917 = vmatpush1.bf16.msra.mxu0 0
      %918 = vmatprep.subr.bf16.mxu0 0
      %919 = vmatpush1.bf16.msra.mxu0 0
      %920 = vmatprep.subr.bf16.mxu0 0
      %921 = vmatpush1.bf16.msra.mxu0 0
      %922 = vmatprep.subr.bf16.mxu0 0
      %923 = vmatpush1.bf16.msra.mxu0 0
      %924 = vmatprep.subr.bf16.mxu0 0
      %925 = vmatpush1.bf16.msra.mxu0 0
      %926 = vmatprep.subr.bf16.mxu0 0
      %927 = vmatpush1.bf16.msra.mxu0 0
      %928 = vmatprep.mubr.bf16.mxu0 0
      %929 = vmatmul.mubr.bf16.gmra.mrb[0].mxu0 %v841
      %v930 = vpop.f32.mrb[0].mxu0
      %v931 = vadd.f32 0.0, %v930
      %v932 = vpop.f32.mrb[0].mxu0
      %v933 = vadd.f32 0.0, %v932
      %v934 = vpop.f32.mrb[0].mxu0
      %v935 = vpop.f32.mrb[0].mxu0
      %936 = vdwg.mxu0
      %937 = vset.pattern.permute.xlu0 2
      %938 = vperm.xlu0 %937, %v247
      %v939 = vpop.permute.xlu0 %938
      %v941 = vmul.f32 %v890, %v939
      %v942 = vmul.f32 %v892, %v939
      %v943 = vmul.f32 %v931, %v939
      %v944 = vmul.f32 %v933, %v939
      %945 = vset.pattern.permute.xlu0 3
      %946 = vperm.xlu0 %945, %v247
      %v947 = vpop.permute.xlu0 %946
      %v949 = vadd.f32 %v941, %v947
      %v950 = vadd.f32 %v942, %v947
      %v951 = vadd.f32 %v943, %v947
      %v952 = vadd.f32 %v944, %v947
      %v953 = vadd.f32 %v949, %v234
      %v954 = vadd.f32 %v950, %v235
      %v955 = vadd.f32 %v951, %v237
      %v956 = vadd.f32 %v952, %v238
      %v957 = vmax.f32 %v953, 0.0
      %v958 = vmax.f32 %v954, 0.0
      %v959 = vmax.f32 %v955, 0.0
      %v960 = vmax.f32 %v956, 0.0
      %v961 = vmin.f32 %v957, 10.0
      %v962 = vmin.f32 %v958, 10.0
      %v963 = vmin.f32 %v959, 10.0
      %v964 = vmin.f32 %v960, 10.0
      %v965 = vmul.f32 %v961, 1.5
      %v966 = vmul.f32 %v962, 1.5
      %v967 = vmul.f32 %v963, 1.5
      %v968 = vmul.f32 %v964, 1.5
      %v969 = vround.ne.pseudo %v965
      %v970 = vround.ne.pseudo %v966
      %v971 = vround.ne.pseudo %v967
      %v972 = vround.ne.pseudo %v968
      %v973 = vmul.f32 %v969, 0.6666667
      %v974 = vmul.f32 %v970, 0.6666667
      %v975 = vmul.f32 %v971, 0.6666667
      %v976 = vmul.f32 %v972, 0.6666667
      %977 = vst [vmem:[%s231] sm:$0xff] %v973
      %978 = vst [vmem:[%s231 + $0x8] sm:$0xff] %v974
      %s979 = scalar_lea.vmem %s231, 16
      %980 = vst [vmem:[%s979] sm:$0xff] %v975
      %981 = vst [vmem:[%s979 + $0x8] sm:$0xff] %v976
      %s982 = smul.u32 2, %s16
      %p983 = scmp.lt.s32.totalorder %s982, 7
      %s984 = scalar_select %p983, %s982, 7
      %s985 = smul.addr %s984, 2
      %s986 = smul.addr %s985, 8
      %s987 = scalar_lea.vmem %s5, %s986
      // Predicated region
      $region41: #{basic_block_forward.1} parent=39 // pred_check
        %p988 = pneg %p144
      $region42: #{basic_block_forward.1} parent=39 // pred_check_branch
        %990 = sbr.rel (%p988) target = $region44
      $region43: #{basic_block_forward.1} parent=39 // pred_region
        %s991 = smul.u32 2, %s16
      $region44: #{basic_block_forward.1} parent=39 // pred_fallthru
        _
    $region40: #{basic_block_forward.1} parent=5 // pred_fallthru
      _
    %p992 = scmp.le.s32.totalorder 2, %s11
    // Predicated region
    $region45: #{basic_block_forward.1} parent=5 // pred_check
      %p993 = pneg %p992
    $region46: #{basic_block_forward.1} parent=5 // pred_check_branch
      %995 = sbr.rel (%p993) target = $region48
    $region47: #{basic_block_forward.1} parent=5 // pred_region
      %s996 = ssub.s32 %s11, 2
      // Predicated region
      $region49: #{basic_block_forward.1} parent=47 // pred_check
        %p997 = pneg %p150
      $region50: #{basic_block_forward.1} parent=47 // pred_check_branch
        %999 = sbr.rel (%p997) target = $region52
      $region51: #{basic_block_forward.1} parent=47 // pred_region
        %s1000 = smul.u32 2, %s17
        %p1001 = scmp.lt.s32.totalorder %s1000, 7
        %s1002 = scalar_select %p1001, %s1000, 7
        %s1003 = smul.addr %s1002, 2
        %s1004 = smul.addr %s1003, 8
        %s1005 = scalar_lea.vmem %s5, %s1004
      $region52: #{basic_block_forward.1} parent=47 // pred_fallthru
        _
    $region48: #{basic_block_forward.1} parent=5 // pred_fallthru
      _
  $region6: #{basic_block_forward.1} parent=0 // loop_footer
    %s15 = sadd.s32 1, %s11
  $region7: #{basic_block_forward.1} parent=0 // loop_footer_branch
    %10 = sbr.rel target = $region3
  $region8: #{basic_block_forward.1} parent=0 // loop_exit
    _

</llo_original>
